<compile_context>
chip_gen: v5e
topology: v5e:2x2
jax: 0.10.0
libtpu: 0.0.40
codegen_flags: <defaults>
</compile_context>

<pallas_src>
import functools

import jax
import jax.numpy as jnp
from jax.experimental import pallas as pl
from jax.experimental.pallas import tpu as pltpu


def _cut_edge_conv_kernel(x_ref, w_ref, b_ref, o_ref, *, H, W):
    # x_ref: (Nb, C, H*W)   input block, NCHW with spatial flattened on lanes
    # w_ref: (O, 4*C)       weights: w_ref[o, (dh*2+dw)*C + c] = w[o, c, dh, dw]
    # b_ref: (O, 1)         bias
    # o_ref: (Nb, O, H*W)   FULL (un-cropped) output block, lane-dense
    Nb, C, HW = x_ref.shape
    O = o_ref.shape[1]

    xb = x_ref[...]          # (Nb, C, HW) -- whole batch block at once
    wt = w_ref[...]          # (O, 4C)     -- tiny, loaded once per block
    bt = b_ref[...]          # (O, 1)

    acc = jnp.zeros((Nb, O, HW), dtype=jnp.float32)

    # 2x2 conv = 4 shifted taps; each tap is C broadcast-FMAs on the VPU.
    # Rolls and weight-column broadcasts are emitted once per grid step.
    for dh in range(2):
        for dw in range(2):
            d = dh * W + dw
            if d == 0:
                shifted = xb
            else:
                # shifted[n, c, p] == xb[n, c, p + d]; the wrap-around lands
                # only in the cut edge (last row/column), cropped in wrapper.
                shifted = pltpu.roll(xb, shift=HW - d, axis=2)
            for c in range(C):
                k = (dh * 2 + dw) * C + c
                # (1,O,1) lane-broadcast * (Nb,1,HW) sublane-broadcast
                acc = acc + wt[None, :, k:k + 1] * shifted[:, c:c + 1, :]

    # bias + ReLU kept in f32, single cast, one full-block lane-dense store.
    acc = jnp.maximum(acc + bt[None, :, :], 0.0)
    o_ref[...] = acc.astype(o_ref.dtype)


def _num_tensorcores_per_chip():
    # v7x-class chips have 2 TensorCores per chip; v5e/v6e have 1.
    try:
        kind = jax.devices()[0].device_kind.lower()
    except Exception:
        return 1
    return 2 if ("v7" in kind or "7x" in kind) else 1


def cut_edge_conv(x_nchw, weight_oihw, bias, *, batch_block=None):
    """Conv2d(kernel_size=2, stride=1, padding=0) + ReLU.

    x_nchw:      (N, C, H, W)   float32
    weight_oihw: (O, C, 2, 2)   float32  (PyTorch Conv2d layout)
    bias:        (O,)           float32
    returns:     (N, O, H-1, W-1)
    """
    N, C, H, W = x_nchw.shape
    O = weight_oihw.shape[0]
    Ho, Wo = H - 1, W - 1
    HW = H * W

    # Glue: contiguous reshape of x + tiny weight repack only; no HBM
    # transpose passes over x or the output.
    x2 = x_nchw.reshape(N, C, HW)
    w2 = jnp.transpose(weight_oihw, (0, 2, 3, 1)).reshape(O, 4 * C)  # (O, 4C)
    b2 = bias.reshape(O, 1)

    if batch_block is None:
        # Fold many batch elements per grid step (amortize ~0.35us/step +
        # DMA setup); per-batch block data is only ~12 KB so VMEM is never
        # the limit, but keep a double-buffered safety cap anyway.
        bytes_per_batch = 4 * (C + O) * HW
        vmem_cap = max(1, (8 * 1024 * 1024) // max(1, 2 * bytes_per_batch))
        nb = min(16, N, vmem_cap)
        if _num_tensorcores_per_chip() >= 2 and N >= 2:
            # Only on 2-TC chips (v7x): keep >= 2 "parallel" grid steps so
            # both TensorCores get work.
            nb = min(nb, max(1, N // 2))
        batch_block = max(1, nb)
    Nb = batch_block
    grid = (pl.cdiv(N, Nb),)

    kernel = functools.partial(_cut_edge_conv_kernel, H=H, W=W)

    out_full = pl.pallas_call(
        kernel,
        out_shape=jax.ShapeDtypeStruct((N, O, HW), x_nchw.dtype),
        grid=grid,
        in_specs=[
            pl.BlockSpec((Nb, C, HW), lambda i: (i, 0, 0)),
            pl.BlockSpec((O, 4 * C), lambda i: (0, 0)),
            pl.BlockSpec((O, 1), lambda i: (0, 0)),
        ],
        out_specs=pl.BlockSpec((Nb, O, HW), lambda i: (i, 0, 0)),
        compiler_params=pltpu.CompilerParams(
            dimension_semantics=("parallel",),
            vmem_limit_bytes=32 * 1024 * 1024,
        ),
    )(x2, w2, b2)

    # Free contiguous reshape + cheap XLA slice to crop the cut edge.
    return out_full.reshape(N, O, H, W)[:, :, :Ho, :Wo]


if __name__ == "__main__":
    in_ch, out_ch = 4, 8
    N, H, W = 2, 16, 16

    key = jax.random.PRNGKey(0)
    kx, kw, kb = jax.random.split(key, 3)

    # Deterministic parameter init (PyTorch-style uniform bound = 1/sqrt(fan_in)).
    fan_in = in_ch * 2 * 2
    bound = 1.0 / (fan_in ** 0.5)
    weight = jax.random.uniform(kw, (out_ch, in_ch, 2, 2), jnp.float32,
                                minval=-bound, maxval=bound)
    bias = jax.random.uniform(kb, (out_ch,), jnp.float32,
                              minval=-bound, maxval=bound)
    x = jax.random.normal(kx, (N, in_ch, H, W), jnp.float32)

    out = cut_edge_conv(x, weight, bias)
    out = jax.block_until_ready(out)

    # Reference check against XLA conv (plain JAX, not part of the kernel).
    ref = jax.lax.conv_general_dilated(
        x, weight, window_strides=(1, 1), padding="VALID",
        dimension_numbers=("NCHW", "OIHW", "NCHW"))
    ref = jnp.maximum(ref + bias[None, :, None, None], 0.0)

    assert out.shape == (N, out_ch, H - 1, W - 1), out.shape
    assert jnp.allclose(out, ref, atol=1e-5, rtol=1e-5), \
        float(jnp.max(jnp.abs(out - ref)))

    print("KERNEL_OK")
</pallas_src>

<mosaic_0001>
module attributes {stable_mosaic.version = 11 : i64} {
  func.func @_cut_edge_conv_kernel(%arg0: i32, %arg1: memref<2x4x256xf32, #tpu.memory_space<vmem>>, %arg2: memref<8x16xf32, #tpu.memory_space<vmem>>, %arg3: memref<8x1xf32, #tpu.memory_space<vmem>>, %arg4: memref<2x8x256xf32, #tpu.memory_space<vmem>>) attributes {dimension_semantics = [#tpu.dimension_semantics<parallel>], iteration_bounds = array<i64: 1>, scalar_prefetch = 0 : i64, scratch_operands = 0 : i64, tpu.core_type = #tpu.core_type<tc>, window_params = [{transform_indices = @transform_0, window_bounds = array<i64: 2, 4, 256>}, {pipeline_mode = #tpu.pipeline_mode<synchronous>, transform_indices = @transform_1, window_bounds = array<i64: 8, 16>}, {pipeline_mode = #tpu.pipeline_mode<synchronous>, transform_indices = @transform_2, window_bounds = array<i64: 8, 1>}, {transform_indices = @transform_3, window_bounds = array<i64: 2, 8, 256>}]} {
    %c0 = arith.constant 0 : index
    %c0_0 = arith.constant 0 : index
    %c0_1 = arith.constant 0 : index
    %0 = vector.load %arg1[%c0, %c0_0, %c0_1] : memref<2x4x256xf32, #tpu.memory_space<vmem>>, vector<2x4x256xf32>
    %c0_2 = arith.constant 0 : index
    %c0_3 = arith.constant 0 : index
    %1 = vector.load %arg2[%c0_2, %c0_3] : memref<8x16xf32, #tpu.memory_space<vmem>>, vector<8x16xf32>
    %c0_4 = arith.constant 0 : index
    %c0_5 = arith.constant 0 : index
    %2 = vector.load %arg3[%c0_4, %c0_5] : memref<8x1xf32, #tpu.memory_space<vmem>>, vector<8x1xf32>
    %cst = arith.constant 0.000000e+00 : f32
    %3 = vector.broadcast %cst : f32 to vector<2x8x256xf32>
    %4 = vector.extract_strided_slice %1 {offsets = [0, 0], sizes = [8, 1], strides = [1, 1]} : vector<8x16xf32> to vector<8x1xf32>
    %5 = vector.shape_cast %4 : vector<8x1xf32> to vector<1x8x1xf32>
    %6 = vector.extract_strided_slice %0 {offsets = [0, 0, 0], sizes = [2, 1, 256], strides = [1, 1, 1]} : vector<2x4x256xf32> to vector<2x1x256xf32>
    %7 = vector.broadcast %5 : vector<1x8x1xf32> to vector<2x8x256xf32>
    %8 = vector.broadcast %6 : vector<2x1x256xf32> to vector<2x8x256xf32>
    %9 = arith.mulf %7, %8 : vector<2x8x256xf32>
    %10 = arith.addf %3, %9 : vector<2x8x256xf32>
    %11 = vector.extract_strided_slice %1 {offsets = [0, 1], sizes = [8, 1], strides = [1, 1]} : vector<8x16xf32> to vector<8x1xf32>
    %12 = vector.shape_cast %11 : vector<8x1xf32> to vector<1x8x1xf32>
    %13 = vector.extract_strided_slice %0 {offsets = [0, 1, 0], sizes = [2, 1, 256], strides = [1, 1, 1]} : vector<2x4x256xf32> to vector<2x1x256xf32>
    %14 = vector.broadcast %12 : vector<1x8x1xf32> to vector<2x8x256xf32>
    %15 = vector.broadcast %13 : vector<2x1x256xf32> to vector<2x8x256xf32>
    %16 = arith.mulf %14, %15 : vector<2x8x256xf32>
    %17 = arith.addf %10, %16 : vector<2x8x256xf32>
    %18 = vector.extract_strided_slice %1 {offsets = [0, 2], sizes = [8, 1], strides = [1, 1]} : vector<8x16xf32> to vector<8x1xf32>
    %19 = vector.shape_cast %18 : vector<8x1xf32> to vector<1x8x1xf32>
    %20 = vector.extract_strided_slice %0 {offsets = [0, 2, 0], sizes = [2, 1, 256], strides = [1, 1, 1]} : vector<2x4x256xf32> to vector<2x1x256xf32>
    %21 = vector.broadcast %19 : vector<1x8x1xf32> to vector<2x8x256xf32>
    %22 = vector.broadcast %20 : vector<2x1x256xf32> to vector<2x8x256xf32>
    %23 = arith.mulf %21, %22 : vector<2x8x256xf32>
    %24 = arith.addf %17, %23 : vector<2x8x256xf32>
    %25 = vector.extract_strided_slice %1 {offsets = [0, 3], sizes = [8, 1], strides = [1, 1]} : vector<8x16xf32> to vector<8x1xf32>
    %26 = vector.shape_cast %25 : vector<8x1xf32> to vector<1x8x1xf32>
    %27 = vector.extract_strided_slice %0 {offsets = [0, 3, 0], sizes = [2, 1, 256], strides = [1, 1, 1]} : vector<2x4x256xf32> to vector<2x1x256xf32>
    %28 = vector.broadcast %26 : vector<1x8x1xf32> to vector<2x8x256xf32>
    %29 = vector.broadcast %27 : vector<2x1x256xf32> to vector<2x8x256xf32>
    %30 = arith.mulf %28, %29 : vector<2x8x256xf32>
    %31 = arith.addf %24, %30 : vector<2x8x256xf32>
    %c255_i32 = arith.constant 255 : i32
    %32 = tpu.dynamic_rotate %0 by %c255_i32 dim 2 : vector<2x4x256xf32>, i32 -> vector<2x4x256xf32>
    %33 = vector.extract_strided_slice %1 {offsets = [0, 4], sizes = [8, 1], strides = [1, 1]} : vector<8x16xf32> to vector<8x1xf32>
    %34 = vector.shape_cast %33 : vector<8x1xf32> to vector<1x8x1xf32>
    %35 = vector.extract_strided_slice %32 {offsets = [0, 0, 0], sizes = [2, 1, 256], strides = [1, 1, 1]} : vector<2x4x256xf32> to vector<2x1x256xf32>
    %36 = vector.broadcast %34 : vector<1x8x1xf32> to vector<2x8x256xf32>
    %37 = vector.broadcast %35 : vector<2x1x256xf32> to vector<2x8x256xf32>
    %38 = arith.mulf %36, %37 : vector<2x8x256xf32>
    %39 = arith.addf %31, %38 : vector<2x8x256xf32>
    %40 = vector.extract_strided_slice %1 {offsets = [0, 5], sizes = [8, 1], strides = [1, 1]} : vector<8x16xf32> to vector<8x1xf32>
    %41 = vector.shape_cast %40 : vector<8x1xf32> to vector<1x8x1xf32>
    %42 = vector.extract_strided_slice %32 {offsets = [0, 1, 0], sizes = [2, 1, 256], strides = [1, 1, 1]} : vector<2x4x256xf32> to vector<2x1x256xf32>
    %43 = vector.broadcast %41 : vector<1x8x1xf32> to vector<2x8x256xf32>
    %44 = vector.broadcast %42 : vector<2x1x256xf32> to vector<2x8x256xf32>
    %45 = arith.mulf %43, %44 : vector<2x8x256xf32>
    %46 = arith.addf %39, %45 : vector<2x8x256xf32>
    %47 = vector.extract_strided_slice %1 {offsets = [0, 6], sizes = [8, 1], strides = [1, 1]} : vector<8x16xf32> to vector<8x1xf32>
    %48 = vector.shape_cast %47 : vector<8x1xf32> to vector<1x8x1xf32>
    %49 = vector.extract_strided_slice %32 {offsets = [0, 2, 0], sizes = [2, 1, 256], strides = [1, 1, 1]} : vector<2x4x256xf32> to vector<2x1x256xf32>
    %50 = vector.broadcast %48 : vector<1x8x1xf32> to vector<2x8x256xf32>
    %51 = vector.broadcast %49 : vector<2x1x256xf32> to vector<2x8x256xf32>
    %52 = arith.mulf %50, %51 : vector<2x8x256xf32>
    %53 = arith.addf %46, %52 : vector<2x8x256xf32>
    %54 = vector.extract_strided_slice %1 {offsets = [0, 7], sizes = [8, 1], strides = [1, 1]} : vector<8x16xf32> to vector<8x1xf32>
    %55 = vector.shape_cast %54 : vector<8x1xf32> to vector<1x8x1xf32>
    %56 = vector.extract_strided_slice %32 {offsets = [0, 3, 0], sizes = [2, 1, 256], strides = [1, 1, 1]} : vector<2x4x256xf32> to vector<2x1x256xf32>
    %57 = vector.broadcast %55 : vector<1x8x1xf32> to vector<2x8x256xf32>
    %58 = vector.broadcast %56 : vector<2x1x256xf32> to vector<2x8x256xf32>
    %59 = arith.mulf %57, %58 : vector<2x8x256xf32>
    %60 = arith.addf %53, %59 : vector<2x8x256xf32>
    %c240_i32 = arith.constant 240 : i32
    %61 = tpu.dynamic_rotate %0 by %c240_i32 dim 2 : vector<2x4x256xf32>, i32 -> vector<2x4x256xf32>
    %62 = vector.extract_strided_slice %1 {offsets = [0, 8], sizes = [8, 1], strides = [1, 1]} : vector<8x16xf32> to vector<8x1xf32>
    %63 = vector.shape_cast %62 : vector<8x1xf32> to vector<1x8x1xf32>
    %64 = vector.extract_strided_slice %61 {offsets = [0, 0, 0], sizes = [2, 1, 256], strides = [1, 1, 1]} : vector<2x4x256xf32> to vector<2x1x256xf32>
    %65 = vector.broadcast %63 : vector<1x8x1xf32> to vector<2x8x256xf32>
    %66 = vector.broadcast %64 : vector<2x1x256xf32> to vector<2x8x256xf32>
    %67 = arith.mulf %65, %66 : vector<2x8x256xf32>
    %68 = arith.addf %60, %67 : vector<2x8x256xf32>
    %69 = vector.extract_strided_slice %1 {offsets = [0, 9], sizes = [8, 1], strides = [1, 1]} : vector<8x16xf32> to vector<8x1xf32>
    %70 = vector.shape_cast %69 : vector<8x1xf32> to vector<1x8x1xf32>
    %71 = vector.extract_strided_slice %61 {offsets = [0, 1, 0], sizes = [2, 1, 256], strides = [1, 1, 1]} : vector<2x4x256xf32> to vector<2x1x256xf32>
    %72 = vector.broadcast %70 : vector<1x8x1xf32> to vector<2x8x256xf32>
    %73 = vector.broadcast %71 : vector<2x1x256xf32> to vector<2x8x256xf32>
    %74 = arith.mulf %72, %73 : vector<2x8x256xf32>
    %75 = arith.addf %68, %74 : vector<2x8x256xf32>
    %76 = vector.extract_strided_slice %1 {offsets = [0, 10], sizes = [8, 1], strides = [1, 1]} : vector<8x16xf32> to vector<8x1xf32>
    %77 = vector.shape_cast %76 : vector<8x1xf32> to vector<1x8x1xf32>
    %78 = vector.extract_strided_slice %61 {offsets = [0, 2, 0], sizes = [2, 1, 256], strides = [1, 1, 1]} : vector<2x4x256xf32> to vector<2x1x256xf32>
    %79 = vector.broadcast %77 : vector<1x8x1xf32> to vector<2x8x256xf32>
    %80 = vector.broadcast %78 : vector<2x1x256xf32> to vector<2x8x256xf32>
    %81 = arith.mulf %79, %80 : vector<2x8x256xf32>
    %82 = arith.addf %75, %81 : vector<2x8x256xf32>
    %83 = vector.extract_strided_slice %1 {offsets = [0, 11], sizes = [8, 1], strides = [1, 1]} : vector<8x16xf32> to vector<8x1xf32>
    %84 = vector.shape_cast %83 : vector<8x1xf32> to vector<1x8x1xf32>
    %85 = vector.extract_strided_slice %61 {offsets = [0, 3, 0], sizes = [2, 1, 256], strides = [1, 1, 1]} : vector<2x4x256xf32> to vector<2x1x256xf32>
    %86 = vector.broadcast %84 : vector<1x8x1xf32> to vector<2x8x256xf32>
    %87 = vector.broadcast %85 : vector<2x1x256xf32> to vector<2x8x256xf32>
    %88 = arith.mulf %86, %87 : vector<2x8x256xf32>
    %89 = arith.addf %82, %88 : vector<2x8x256xf32>
    %c239_i32 = arith.constant 239 : i32
    %90 = tpu.dynamic_rotate %0 by %c239_i32 dim 2 : vector<2x4x256xf32>, i32 -> vector<2x4x256xf32>
    %91 = vector.extract_strided_slice %1 {offsets = [0, 12], sizes = [8, 1], strides = [1, 1]} : vector<8x16xf32> to vector<8x1xf32>
    %92 = vector.shape_cast %91 : vector<8x1xf32> to vector<1x8x1xf32>
    %93 = vector.extract_strided_slice %90 {offsets = [0, 0, 0], sizes = [2, 1, 256], strides = [1, 1, 1]} : vector<2x4x256xf32> to vector<2x1x256xf32>
    %94 = vector.broadcast %92 : vector<1x8x1xf32> to vector<2x8x256xf32>
    %95 = vector.broadcast %93 : vector<2x1x256xf32> to vector<2x8x256xf32>
    %96 = arith.mulf %94, %95 : vector<2x8x256xf32>
    %97 = arith.addf %89, %96 : vector<2x8x256xf32>
    %98 = vector.extract_strided_slice %1 {offsets = [0, 13], sizes = [8, 1], strides = [1, 1]} : vector<8x16xf32> to vector<8x1xf32>
    %99 = vector.shape_cast %98 : vector<8x1xf32> to vector<1x8x1xf32>
    %100 = vector.extract_strided_slice %90 {offsets = [0, 1, 0], sizes = [2, 1, 256], strides = [1, 1, 1]} : vector<2x4x256xf32> to vector<2x1x256xf32>
    %101 = vector.broadcast %99 : vector<1x8x1xf32> to vector<2x8x256xf32>
    %102 = vector.broadcast %100 : vector<2x1x256xf32> to vector<2x8x256xf32>
    %103 = arith.mulf %101, %102 : vector<2x8x256xf32>
    %104 = arith.addf %97, %103 : vector<2x8x256xf32>
    %105 = vector.extract_strided_slice %1 {offsets = [0, 14], sizes = [8, 1], strides = [1, 1]} : vector<8x16xf32> to vector<8x1xf32>
    %106 = vector.shape_cast %105 : vector<8x1xf32> to vector<1x8x1xf32>
    %107 = vector.extract_strided_slice %90 {offsets = [0, 2, 0], sizes = [2, 1, 256], strides = [1, 1, 1]} : vector<2x4x256xf32> to vector<2x1x256xf32>
    %108 = vector.broadcast %106 : vector<1x8x1xf32> to vector<2x8x256xf32>
    %109 = vector.broadcast %107 : vector<2x1x256xf32> to vector<2x8x256xf32>
    %110 = arith.mulf %108, %109 : vector<2x8x256xf32>
    %111 = arith.addf %104, %110 : vector<2x8x256xf32>
    %112 = vector.extract_strided_slice %1 {offsets = [0, 15], sizes = [8, 1], strides = [1, 1]} : vector<8x16xf32> to vector<8x1xf32>
    %113 = vector.shape_cast %112 : vector<8x1xf32> to vector<1x8x1xf32>
    %114 = vector.extract_strided_slice %90 {offsets = [0, 3, 0], sizes = [2, 1, 256], strides = [1, 1, 1]} : vector<2x4x256xf32> to vector<2x1x256xf32>
    %115 = vector.broadcast %113 : vector<1x8x1xf32> to vector<2x8x256xf32>
    %116 = vector.broadcast %114 : vector<2x1x256xf32> to vector<2x8x256xf32>
    %117 = arith.mulf %115, %116 : vector<2x8x256xf32>
    %118 = arith.addf %111, %117 : vector<2x8x256xf32>
    %119 = vector.shape_cast %2 : vector<8x1xf32> to vector<1x8x1xf32>
    %120 = vector.broadcast %119 : vector<1x8x1xf32> to vector<2x8x256xf32>
    %121 = arith.addf %118, %120 : vector<2x8x256xf32>
    %cst_6 = arith.constant 0.000000e+00 : f32
    %122 = vector.broadcast %cst_6 : f32 to vector<2x8x256xf32>
    %123 = arith.maximumf %121, %122 : vector<2x8x256xf32>
    %c0_7 = arith.constant 0 : index
    %c0_8 = arith.constant 0 : index
    %c0_9 = arith.constant 0 : index
    %124 = vector.load %arg4[%c0_7, %c0_8, %c0_9] : memref<2x8x256xf32, #tpu.memory_space<vmem>>, vector<2x8x256xf32>
    tpu.vector_store %arg4[%c0_7, %c0_8, %c0_9], %123 {strides = array<i32>} : memref<2x8x256xf32, #tpu.memory_space<vmem>>, vector<2x8x256xf32>,
    return
  }
  func.func @transform_0(%arg0: i32) -> (i32, i32, i32) {
    %c0_i32 = arith.constant 0 : i32
    %c0_i32_0 = arith.constant 0 : i32
    %c0_i32_1 = arith.constant 0 : i32
    return %arg0, %c0_i32, %c0_i32_0 : i32, i32, i32
  }
  func.func @transform_1(%arg0: i32) -> (i32, i32) {
    %c0_i32 = arith.constant 0 : i32
    %c0_i32_0 = arith.constant 0 : i32
    %c0_i32_1 = arith.constant 0 : i32
    return %c0_i32, %c0_i32_0 : i32, i32
  }
  func.func @transform_2(%arg0: i32) -> (i32, i32) {
    %c0_i32 = arith.constant 0 : i32
    %c0_i32_0 = arith.constant 0 : i32
    %c0_i32_1 = arith.constant 0 : i32
    return %c0_i32, %c0_i32_0 : i32, i32
  }
  func.func @transform_3(%arg0: i32) -> (i32, i32, i32) {
    %c0_i32 = arith.constant 0 : i32
    %c0_i32_0 = arith.constant 0 : i32
    %c0_i32_1 = arith.constant 0 : i32
    return %arg0, %c0_i32, %c0_i32_0 : i32, i32, i32
  }
}

</mosaic_0001>

<llo_original>
// kernel: tpu_custom_call.1
$region0: #{tpu_custom_call.1}
  #allocation0 [shape = 'u32[]', space=smem, size = 0x4, offset = 0x4, fixed_abs, tag = 'smem constant byte address 0x4 - core index']
  #allocation1 [shape = 'u32[72,128]{1,0:T(1,128)}', space=vmem, size = 0x9000, scoped, tag = 'internal scratch']
  %s0 = inlined_call_operand.hbm [shape: f32[2,4,256], index: 0, kind: input, shape index: {}]
  %s1 = inlined_call_operand.vmem [shape: f32[8,16], index: 1, kind: input, shape index: {}]
  %s2 = inlined_call_operand.vmem [shape: f32[8,1], index: 2, kind: input, shape index: {}]
  %s3 = inlined_call_operand.hbm [shape: f32[2,8,256], index: 3, kind: output, shape index: {}]
  %s4 = sld [smem:[#allocation0]]
  $region26: #{tpu_custom_call.1} parent=0
    _
  %s6 = ssub.s32 1, %s4
  %s7 = scalar_select 0, %s6, %s4
  $region1: #{tpu_custom_call.1} parent=0
    #allocation2 [shape = 'u8[8192]{0}', space=vmem, size = 0x2000, scoped, tag = 'input window, operand 0, single buffered']
    #allocation3 [shape = 's32[1]{0}', space=sflag, size = 0x4, scoped, tag = 'scoped memory for tpu_custom_call.1']
    #allocation4 [shape = 's32[1]{0}', space=sflag, size = 0x4, scoped, tag = 'scoped memory for tpu_custom_call.1']
    #allocation5 [shape = 'u8[16384]{0}', space=vmem, size = 0x4000, scoped, tag = 'output window, operand 0, single buffered']
    %8 = vsyncpa [#allocation3], 0
    %9 = vsyncpa [#allocation4], 0
    // Predicated region
    $region2: #{tpu_custom_call.1} parent=1 // pred_check
      _
    $region3: #{tpu_custom_call.1} parent=1 // pred_check_branch
      %11 = sbr.rel (0) target = $region5
    $region4: #{tpu_custom_call.1} parent=1 // pred_region
      %13 = vsyncadd [#allocation3], 0
      %s14 = sshll.u32 %s0, 4
      %s15 = int_to_ptr.hbm [resolvable:$true] %s14
      %s16 = sshll.u32 [#allocation2], 4
      %s17 = int_to_ptr.vmem [resolvable:$true] %s16
      %22 = dma.hbm_to_vmem [thread:$0]  %s15, 256, %s17, [#allocation3], 128, 128, 8
    $region5: #{tpu_custom_call.1} parent=1 // pred_fallthru
      _
    // Predicated region
    $region6: #{tpu_custom_call.1} parent=1 // pred_check
      _
    $region7: #{tpu_custom_call.1} parent=1 // pred_check_branch
      %24 = sbr.rel (0) target = $region9
    $region8: #{tpu_custom_call.1} parent=1 // pred_region
      _
    $region9: #{tpu_custom_call.1} parent=1 // pred_fallthru
      _
    // Predicated region
    $region10: #{tpu_custom_call.1} parent=1 // pred_check
      _
    $region11: #{tpu_custom_call.1} parent=1 // pred_check_branch
      %26 = sbr.rel (0) target = $region13
    $region12: #{tpu_custom_call.1} parent=1 // pred_region
      _
    $region13: #{tpu_custom_call.1} parent=1 // pred_fallthru
      _
    // Predicated region
    $region14: #{tpu_custom_call.1} parent=1 // pred_check
      _
    $region15: #{tpu_custom_call.1} parent=1 // pred_check_branch
      %28 = sbr.rel (0) target = $region17
    $region16: #{tpu_custom_call.1} parent=1 // pred_region
      %30 = dma.done [#allocation3], 256
    $region17: #{tpu_custom_call.1} parent=1 // pred_fallthru
      _
    %v31 = vld [vmem:[#allocation2] sm:$0xff]
    %v32 = vld [vmem:[#allocation2 + $0x8] sm:$0xff]
    %v33 = vld [vmem:[%s1] sm:$0xff]
    %v34 = vld [vmem:[%s2] sm:$0xff]
    %36 = vset.pattern.permute.xlu0 0
    %37 = vperm.xlu0 %36, %v33
    %v38 = vpop.permute.xlu0 %37
    %v42 = vperm.slane %v31, 0
    %v43 = vperm.slane %v31, 4
    %v44 = vperm.slane %v32, 0
    %v45 = vperm.slane %v32, 4
    %v50 = vperm.slane %v42, 0
    %v51 = vperm.slane %v43, 0
    %v52 = vperm.slane %v44, 0
    %v53 = vperm.slane %v45, 0
    %v54 = vmul.f32 %v38, %v50
    %v55 = vmul.f32 %v38, %v51
    %v56 = vmul.f32 %v38, %v52
    %v57 = vmul.f32 %v38, %v53
    %v58 = vadd.f32 %v54, 0.0
    %v59 = vadd.f32 %v55, 0.0
    %v60 = vadd.f32 %v56, 0.0
    %v61 = vadd.f32 %v57, 0.0
    %62 = vset.pattern.permute.xlu0 1
    %63 = vperm.xlu0 %62, %v33
    %v64 = vpop.permute.xlu0 %63
    %v66 = vperm.slane %v31, 1
    %v67 = vperm.slane %v31, 5
    %v68 = vperm.slane %v32, 1
    %v69 = vperm.slane %v32, 5
    %v74 = vperm.slane %v66, 1
    %v75 = vperm.slane %v67, 1
    %v76 = vperm.slane %v68, 1
    %v77 = vperm.slane %v69, 1
    %v78 = vmul.f32 %v64, %v74
    %v79 = vmul.f32 %v64, %v75
    %v80 = vmul.f32 %v64, %v76
    %v81 = vmul.f32 %v64, %v77
    %v82 = vadd.f32 %v58, %v78
    %v83 = vadd.f32 %v59, %v79
    %v84 = vadd.f32 %v60, %v80
    %v85 = vadd.f32 %v61, %v81
    %86 = vset.pattern.permute.xlu0 2
    %87 = vperm.xlu0 %86, %v33
    %v88 = vpop.permute.xlu0 %87
    %v90 = vperm.slane %v31, 2
    %v91 = vperm.slane %v31, 6
    %v92 = vperm.slane %v32, 2
    %v93 = vperm.slane %v32, 6
    %v98 = vperm.slane %v90, 2
    %v99 = vperm.slane %v91, 2
    %v100 = vperm.slane %v92, 2
    %v101 = vperm.slane %v93, 2
    %v102 = vmul.f32 %v88, %v98
    %v103 = vmul.f32 %v88, %v99
    %v104 = vmul.f32 %v88, %v100
    %v105 = vmul.f32 %v88, %v101
    %v106 = vadd.f32 %v82, %v102
    %v107 = vadd.f32 %v83, %v103
    %v108 = vadd.f32 %v84, %v104
    %v109 = vadd.f32 %v85, %v105
    %110 = vset.pattern.permute.xlu0 3
    %111 = vperm.xlu0 %110, %v33
    %v112 = vpop.permute.xlu0 %111
    %v114 = vperm.slane %v31, 3
    %v115 = vperm.slane %v31, 7
    %v116 = vperm.slane %v32, 3
    %v117 = vperm.slane %v32, 7
    %v122 = vperm.slane %v114, 3
    %v123 = vperm.slane %v115, 3
    %v124 = vperm.slane %v116, 3
    %v125 = vperm.slane %v117, 3
    %v126 = vmul.f32 %v112, %v122
    %v127 = vmul.f32 %v112, %v123
    %v128 = vmul.f32 %v112, %v124
    %v129 = vmul.f32 %v112, %v125
    %v130 = vadd.f32 %v106, %v126
    %v131 = vadd.f32 %v107, %v127
    %v132 = vadd.f32 %v108, %v128
    %v133 = vadd.f32 %v109, %v129
    %134 = vst [vmem:[#allocation1] ss:$2 sm:$0xff] %v31
    %v135 = vld.sshfl [vmem:[#allocation1] sm:$0xff pattern:$0x75316420]
    %v136 = vld.sshfl [vmem:[#allocation1 + $0x8] sm:$0xff pattern:$0x75316420]
    %s137 = scalar_lea.vmem [#allocation1], 16
    %138 = vst [vmem:[%s137] ss:$2 sm:$0xff] %v32
    %v139 = vld.sshfl [vmem:[#allocation1 + $0x10] sm:$0xff pattern:$0x75316420]
    %v140 = vld.sshfl [vmem:[#allocation1 + $0x18] sm:$0xff pattern:$0x75316420]
    %145 = vrot.lane.b32.xlu0 %v135, 127
    %v146 = vpop.permute.xlu0 %145
    %147 = vrot.lane.b32.xlu0 %v139, 127
    %v148 = vpop.permute.xlu0 %147
    %149 = vrot.lane.b32.xlu0 %v136, 127
    %v150 = vpop.permute.xlu0 %149
    %151 = vrot.lane.b32.xlu0 %v140, 127
    %v152 = vpop.permute.xlu0 %151
    %v153 = vlaneseq
    %v154 = vand.u32 %v153, 127
    %vm155 = vcmp.lt.s32.totalorder %v154, 127
    %v156 = vsel %vm155, %v146, %v150
    %v157 = vsel %vm155, %v148, %v152
    %v158 = vsel %vm155, %v150, %v146
    %v159 = vsel %vm155, %v152, %v148
    %160 = vset.pattern.permute.xlu0 4
    %161 = vperm.xlu0 %160, %v33
    %v162 = vpop.permute.xlu0 %161
    %v164 = vperm.slane %v156, 0
    %v165 = vperm.slane %v158, 0
    %v166 = vperm.slane %v157, 0
    %v167 = vperm.slane %v159, 0
    %v168 = vmul.f32 %v162, %v164
    %v169 = vmul.f32 %v162, %v165
    %v170 = vmul.f32 %v162, %v166
    %v171 = vmul.f32 %v162, %v167
    %v172 = vadd.f32 %v130, %v168
    %v173 = vadd.f32 %v131, %v169
    %v174 = vadd.f32 %v132, %v170
    %v175 = vadd.f32 %v133, %v171
    %176 = vset.pattern.permute.xlu0 5
    %177 = vperm.xlu0 %176, %v33
    %v178 = vpop.permute.xlu0 %177
    %v180 = vperm.slane %v156, 1
    %v181 = vperm.slane %v158, 1
    %v182 = vperm.slane %v157, 1
    %v183 = vperm.slane %v159, 1
    %v184 = vmul.f32 %v178, %v180
    %v185 = vmul.f32 %v178, %v181
    %v186 = vmul.f32 %v178, %v182
    %v187 = vmul.f32 %v178, %v183
    %v188 = vadd.f32 %v172, %v184
    %v189 = vadd.f32 %v173, %v185
    %v190 = vadd.f32 %v174, %v186
    %v191 = vadd.f32 %v175, %v187
    %192 = vset.pattern.permute.xlu0 6
    %193 = vperm.xlu0 %192, %v33
    %v194 = vpop.permute.xlu0 %193
    %v196 = vperm.slane %v156, 2
    %v197 = vperm.slane %v158, 2
    %v198 = vperm.slane %v157, 2
    %v199 = vperm.slane %v159, 2
    %v200 = vmul.f32 %v194, %v196
    %v201 = vmul.f32 %v194, %v197
    %v202 = vmul.f32 %v194, %v198
    %v203 = vmul.f32 %v194, %v199
    %v204 = vadd.f32 %v188, %v200
    %v205 = vadd.f32 %v189, %v201
    %v206 = vadd.f32 %v190, %v202
    %v207 = vadd.f32 %v191, %v203
    %208 = vset.pattern.permute.xlu0 7
    %209 = vperm.xlu0 %208, %v33
    %v210 = vpop.permute.xlu0 %209
    %v212 = vperm.slane %v156, 3
    %v213 = vperm.slane %v158, 3
    %v214 = vperm.slane %v157, 3
    %v215 = vperm.slane %v159, 3
    %v216 = vmul.f32 %v210, %v212
    %v217 = vmul.f32 %v210, %v213
    %v218 = vmul.f32 %v210, %v214
    %v219 = vmul.f32 %v210, %v215
    %v220 = vadd.f32 %v204, %v216
    %v221 = vadd.f32 %v205, %v217
    %v222 = vadd.f32 %v206, %v218
    %v223 = vadd.f32 %v207, %v219
    %224 = vst [vmem:[#allocation1] ss:$2 sm:$0xff] %v31
    %v225 = vld.sshfl [vmem:[#allocation1] sm:$0xff pattern:$0x75316420]
    %v226 = vld.sshfl [vmem:[#allocation1 + $0x8] sm:$0xff pattern:$0x75316420]
    %s227 = scalar_lea.vmem [#allocation1], 16
    %228 = vst [vmem:[%s227] ss:$2 sm:$0xff] %v32
    %v229 = vld.sshfl [vmem:[#allocation1 + $0x10] sm:$0xff pattern:$0x75316420]
    %v230 = vld.sshfl [vmem:[#allocation1 + $0x18] sm:$0xff pattern:$0x75316420]
    %235 = vrot.lane.b32.xlu0 %v225, 112
    %v236 = vpop.permute.xlu0 %235
    %237 = vrot.lane.b32.xlu0 %v229, 112
    %v238 = vpop.permute.xlu0 %237
    %239 = vrot.lane.b32.xlu0 %v226, 112
    %v240 = vpop.permute.xlu0 %239
    %241 = vrot.lane.b32.xlu0 %v230, 112
    %v242 = vpop.permute.xlu0 %241
    %vm243 = vcmp.lt.s32.totalorder %v154, 112
    %v244 = vsel %vm243, %v236, %v240
    %v245 = vsel %vm243, %v238, %v242
    %v246 = vsel %vm243, %v240, %v236
    %v247 = vsel %vm243, %v242, %v238
    %248 = vset.pattern.permute.xlu0 8
    %249 = vperm.xlu0 %248, %v33
    %v250 = vpop.permute.xlu0 %249
    %v252 = vperm.slane %v244, 0
    %v253 = vperm.slane %v246, 0
    %v254 = vperm.slane %v245, 0
    %v255 = vperm.slane %v247, 0
    %v256 = vmul.f32 %v250, %v252
    %v257 = vmul.f32 %v250, %v253
    %v258 = vmul.f32 %v250, %v254
    %v259 = vmul.f32 %v250, %v255
    %v260 = vadd.f32 %v220, %v256
    %v261 = vadd.f32 %v221, %v257
    %v262 = vadd.f32 %v222, %v258
    %v263 = vadd.f32 %v223, %v259
    %264 = vset.pattern.permute.xlu0 9
    %265 = vperm.xlu0 %264, %v33
    %v266 = vpop.permute.xlu0 %265
    %v268 = vperm.slane %v244, 1
    %v269 = vperm.slane %v246, 1
    %v270 = vperm.slane %v245, 1
    %v271 = vperm.slane %v247, 1
    %v272 = vmul.f32 %v266, %v268
    %v273 = vmul.f32 %v266, %v269
    %v274 = vmul.f32 %v266, %v270
    %v275 = vmul.f32 %v266, %v271
    %v276 = vadd.f32 %v260, %v272
    %v277 = vadd.f32 %v261, %v273
    %v278 = vadd.f32 %v262, %v274
    %v279 = vadd.f32 %v263, %v275
    %280 = vset.pattern.permute.xlu0 10
    %281 = vperm.xlu0 %280, %v33
    %v282 = vpop.permute.xlu0 %281
    %v284 = vperm.slane %v244, 2
    %v285 = vperm.slane %v246, 2
    %v286 = vperm.slane %v245, 2
    %v287 = vperm.slane %v247, 2
    %v288 = vmul.f32 %v282, %v284
    %v289 = vmul.f32 %v282, %v285
    %v290 = vmul.f32 %v282, %v286
    %v291 = vmul.f32 %v282, %v287
    %v292 = vadd.f32 %v276, %v288
    %v293 = vadd.f32 %v277, %v289
    %v294 = vadd.f32 %v278, %v290
    %v295 = vadd.f32 %v279, %v291
    %296 = vset.pattern.permute.xlu0 11
    %297 = vperm.xlu0 %296, %v33
    %v298 = vpop.permute.xlu0 %297
    %v300 = vperm.slane %v244, 3
    %v301 = vperm.slane %v246, 3
    %v302 = vperm.slane %v245, 3
    %v303 = vperm.slane %v247, 3
    %v304 = vmul.f32 %v298, %v300
    %v305 = vmul.f32 %v298, %v301
    %v306 = vmul.f32 %v298, %v302
    %v307 = vmul.f32 %v298, %v303
    %v308 = vadd.f32 %v292, %v304
    %v309 = vadd.f32 %v293, %v305
    %v310 = vadd.f32 %v294, %v306
    %v311 = vadd.f32 %v295, %v307
    %312 = vst [vmem:[#allocation1] ss:$2 sm:$0xff] %v31
    %v313 = vld.sshfl [vmem:[#allocation1] sm:$0xff pattern:$0x75316420]
    %v314 = vld.sshfl [vmem:[#allocation1 + $0x8] sm:$0xff pattern:$0x75316420]
    %s315 = scalar_lea.vmem [#allocation1], 16
    %316 = vst [vmem:[%s315] ss:$2 sm:$0xff] %v32
    %v317 = vld.sshfl [vmem:[#allocation1 + $0x10] sm:$0xff pattern:$0x75316420]
    %v318 = vld.sshfl [vmem:[#allocation1 + $0x18] sm:$0xff pattern:$0x75316420]
    %323 = vrot.lane.b32.xlu0 %v313, 111
    %v324 = vpop.permute.xlu0 %323
    %325 = vrot.lane.b32.xlu0 %v317, 111
    %v326 = vpop.permute.xlu0 %325
    %327 = vrot.lane.b32.xlu0 %v314, 111
    %v328 = vpop.permute.xlu0 %327
    %329 = vrot.lane.b32.xlu0 %v318, 111
    %v330 = vpop.permute.xlu0 %329
    %vm331 = vcmp.lt.s32.totalorder %v154, 111
    %v332 = vsel %vm331, %v324, %v328
    %v333 = vsel %vm331, %v326, %v330
    %v334 = vsel %vm331, %v328, %v324
    %v335 = vsel %vm331, %v330, %v326
    %336 = vset.pattern.permute.xlu0 12
    %337 = vperm.xlu0 %336, %v33
    %v338 = vpop.permute.xlu0 %337
    %v340 = vperm.slane %v332, 0
    %v341 = vperm.slane %v334, 0
    %v342 = vperm.slane %v333, 0
    %v343 = vperm.slane %v335, 0
    %v344 = vmul.f32 %v338, %v340
    %v345 = vmul.f32 %v338, %v341
    %v346 = vmul.f32 %v338, %v342
    %v347 = vmul.f32 %v338, %v343
    %v348 = vadd.f32 %v308, %v344
    %v349 = vadd.f32 %v309, %v345
    %v350 = vadd.f32 %v310, %v346
    %v351 = vadd.f32 %v311, %v347
    %352 = vset.pattern.permute.xlu0 13
    %353 = vperm.xlu0 %352, %v33
    %v354 = vpop.permute.xlu0 %353
    %v356 = vperm.slane %v332, 1
    %v357 = vperm.slane %v334, 1
    %v358 = vperm.slane %v333, 1
    %v359 = vperm.slane %v335, 1
    %v360 = vmul.f32 %v354, %v356
    %v361 = vmul.f32 %v354, %v357
    %v362 = vmul.f32 %v354, %v358
    %v363 = vmul.f32 %v354, %v359
    %v364 = vadd.f32 %v348, %v360
    %v365 = vadd.f32 %v349, %v361
    %v366 = vadd.f32 %v350, %v362
    %v367 = vadd.f32 %v351, %v363
    %368 = vset.pattern.permute.xlu0 14
    %369 = vperm.xlu0 %368, %v33
    %v370 = vpop.permute.xlu0 %369
    %v372 = vperm.slane %v332, 2
    %v373 = vperm.slane %v334, 2
    %v374 = vperm.slane %v333, 2
    %v375 = vperm.slane %v335, 2
    %v376 = vmul.f32 %v370, %v372
    %v377 = vmul.f32 %v370, %v373
    %v378 = vmul.f32 %v370, %v374
    %v379 = vmul.f32 %v370, %v375
    %v380 = vadd.f32 %v364, %v376
    %v381 = vadd.f32 %v365, %v377
    %v382 = vadd.f32 %v366, %v378
    %v383 = vadd.f32 %v367, %v379
    %384 = vset.pattern.permute.xlu0 15
    %385 = vperm.xlu0 %384, %v33
    %v386 = vpop.permute.xlu0 %385
    %v388 = vperm.slane %v332, 3
    %v389 = vperm.slane %v334, 3
    %v390 = vperm.slane %v333, 3
    %v391 = vperm.slane %v335, 3
    %v392 = vmul.f32 %v386, %v388
    %v393 = vmul.f32 %v386, %v389
    %v394 = vmul.f32 %v386, %v390
    %v395 = vmul.f32 %v386, %v391
    %v396 = vadd.f32 %v380, %v392
    %v397 = vadd.f32 %v381, %v393
    %v398 = vadd.f32 %v382, %v394
    %v399 = vadd.f32 %v383, %v395
    %401 = vset.pattern.permute.xlu0 0
    %402 = vperm.xlu0 %401, %v34
    %v403 = vpop.permute.xlu0 %402
    %v405 = vadd.f32 %v396, %v403
    %v406 = vadd.f32 %v397, %v403
    %v407 = vadd.f32 %v398, %v403
    %v408 = vadd.f32 %v399, %v403
    %v409 = vmax.f32 %v405, 0.0
    %v410 = vmax.f32 %v406, 0.0
    %v411 = vmax.f32 %v407, 0.0
    %v412 = vmax.f32 %v408, 0.0
    %413 = vst [vmem:[#allocation5] sm:$0xff] %v409
    %414 = vst [vmem:[#allocation5 + $0x8] sm:$0xff] %v410
    %415 = vst [vmem:[#allocation5 + $0x10] sm:$0xff] %v411
    %416 = vst [vmem:[#allocation5 + $0x18] sm:$0xff] %v412
    // Predicated region
    $region18: #{tpu_custom_call.1} parent=1 // pred_check
      _
    $region19: #{tpu_custom_call.1} parent=1 // pred_check_branch
      %418 = sbr.rel (0) target = $region21
    $region20: #{tpu_custom_call.1} parent=1 // pred_region
      %420 = vsyncadd [#allocation4], 0
      %s421 = sshll.u32 [#allocation5], 4
      %s422 = int_to_ptr.vmem [resolvable:$true] %s421
      %s423 = sshll.u32 %s3, 4
      %s424 = int_to_ptr.hbm [resolvable:$true] %s423
      %429 = dma.vmem_to_hbm [thread:$0]  %s422, 512, %s424, [#allocation4], 256, 256, 16
    $region21: #{tpu_custom_call.1} parent=1 // pred_fallthru
      _
    // Predicated region
    $region22: #{tpu_custom_call.1} parent=1 // pred_check
      _
    $region23: #{tpu_custom_call.1} parent=1 // pred_check_branch
      %431 = sbr.rel (0) target = $region25
    $region24: #{tpu_custom_call.1} parent=1 // pred_region
      %433 = dma.done [#allocation4], 512
    $region25: #{tpu_custom_call.1} parent=1 // pred_fallthru
      _
    %434 = vsyncpa [#allocation3], 1
    %435 = vsyncpa [#allocation4], 1

</llo_original>
